<compile_context>
chip_gen: v5e
topology: v5e:2x2
jax: 0.10.0
libtpu: 0.0.40
codegen_flags: <defaults>
</compile_context>

<pallas_src>
import numpy as np

import jax
import jax.numpy as jnp
from jax import lax
from jax.experimental import pallas as pl
from jax.experimental.pallas import tpu as pltpu


NO_CLAMP = 1e30  # "no clamp" upper bound for non-sequential edges


# ---------------------------------------------------------------------------
# Pallas kernel: all edges in one shot, weighted/clamped sum finished in-kernel
# ---------------------------------------------------------------------------
def _alignment_loss_kernel(coeff_ref, planes_ref, mask_ref, scal_ref, out_ref):
    # coeff_ref  : (E_pad, 128) f32 VMEM -- lanes 0..11 hold rows 0..2 of the
    #              per-edge 4x4 transform (row-major), rest zero.
    # planes_ref : (6, E_pad, N_pad) f32 VMEM -- x/y/z src, x/y/z tgt planes.
    # mask_ref   : (E_pad, N_pad) f32 VMEM -- 1.0 for valid points, else 0.
    # scal_ref   : (E_pad, 128) f32 VMEM -- lane0=1/max(n,1), lane1=weight,
    #              lane2=clamp upper bound.
    # out_ref    : (1, 1) f32 SMEM -- total weighted loss.
    xs = planes_ref[0]                       # (E_pad, N_pad)
    ys = planes_ref[1]
    zs = planes_ref[2]
    coeff = coeff_ref[...]                   # (E_pad, 128) -- one vreg
    mask = mask_ref[...]                     # (E_pad, N_pad)

    acc = jnp.zeros_like(xs)                 # squared-error accumulator
    # y_i = T[i,0]*x + T[i,1]*y + T[i,2]*z + T[i,3]  (homogeneous row dropped)
    for i in range(3):
        c0 = coeff[:, 4 * i + 0:4 * i + 1]   # (E_pad, 1) per-edge broadcast
        c1 = coeff[:, 4 * i + 1:4 * i + 2]
        c2 = coeff[:, 4 * i + 2:4 * i + 3]
        c3 = coeff[:, 4 * i + 3:4 * i + 4]
        yi = c0 * xs + c1 * ys + c2 * zs + c3
        d = yi - planes_ref[3 + i]
        acc = acc + d * d

    # sqrt(acc) via EUP rsqrt (idle slot); eps kills the 0-gradient hazard.
    dist = mask * (acc * lax.rsqrt(acc + 1e-12))          # (E_pad, N_pad)

    per_edge = jnp.sum(dist, axis=1, keepdims=True)       # (E_pad, 1)
    inv_n = scal_ref[:, 0:1]
    w = scal_ref[:, 1:2]
    hi = scal_ref[:, 2:3]
    mean_d = per_edge * inv_n                              # masked mean
    loss_e = w * jnp.clip(mean_d, 0.0, hi)                 # (E_pad, 1)

    out_ref[0, 0] = jnp.sum(loss_e)                        # scalar to SMEM


def alignment_loss(coeff, planes, mask, scalars):
    """Single-invocation fused loss over all edges. Returns a scalar."""
    out = pl.pallas_call(
        _alignment_loss_kernel,
        out_shape=jax.ShapeDtypeStruct((1, 1), jnp.float32),
        in_specs=[
            pl.BlockSpec(memory_space=pltpu.MemorySpace.VMEM),
            pl.BlockSpec(memory_space=pltpu.MemorySpace.VMEM),
            pl.BlockSpec(memory_space=pltpu.MemorySpace.VMEM),
            pl.BlockSpec(memory_space=pltpu.MemorySpace.VMEM),
        ],
        out_specs=pl.BlockSpec(memory_space=pltpu.MemorySpace.SMEM),
    )(coeff, planes, mask, scalars)
    return out[0, 0]


# ---------------------------------------------------------------------------
# SE(3) utilities (plain JAX glue, matches MonoGS-style SE3_exp) -- vmappable
# ---------------------------------------------------------------------------
def _skew(w):
    wx, wy, wz = w[0], w[1], w[2]
    z = jnp.zeros((), w.dtype)
    return jnp.stack([
        jnp.stack([z, -wz, wy]),
        jnp.stack([wz, z, -wx]),
        jnp.stack([-wy, wx, z]),
    ])


def SO3_exp(theta):
    W = _skew(theta)
    W2 = W @ W
    angle = jnp.linalg.norm(theta)
    eye = jnp.eye(3, dtype=theta.dtype)
    small = angle < 1e-5
    safe = jnp.where(small, jnp.ones_like(angle), angle)
    r_small = eye + W + 0.5 * W2
    r_big = (eye + (jnp.sin(safe) / safe) * W
             + ((1.0 - jnp.cos(safe)) / (safe ** 2)) * W2)
    return jnp.where(small, r_small, r_big)


def _left_jacobian(theta):
    W = _skew(theta)
    W2 = W @ W
    angle = jnp.linalg.norm(theta)
    eye = jnp.eye(3, dtype=theta.dtype)
    small = angle < 1e-5
    safe = jnp.where(small, jnp.ones_like(angle), angle)
    v_small = eye + 0.5 * W + W2 / 6.0
    v_big = (eye + W * ((1.0 - jnp.cos(safe)) / (safe ** 2))
             + W2 * ((safe - jnp.sin(safe)) / (safe ** 3)))
    return jnp.where(small, v_small, v_big)


def SE3_exp(tau):
    rho = tau[:3]
    phi = tau[3:]
    R = SO3_exp(phi)
    t = _left_jacobian(phi) @ rho
    return R, t


# ---------------------------------------------------------------------------
# Batched transform assembly (mirrors get_transform_st / get_transform_loopback)
# ---------------------------------------------------------------------------
def _edge_transform_single(scale, R, T, rot_delta, trans_delta):
    tau = jnp.concatenate([trans_delta, rot_delta])
    delta_r, delta_t = SE3_exp(tau)
    rot = scale[:, None] * (delta_r @ R)          # diag(scale) @ (dR @ R)
    top = jnp.concatenate([rot, (T + delta_t)[:, None]], axis=1)   # (3, 4)
    bottom = jnp.array([[0.0, 0.0, 0.0, 1.0]], jnp.float32)
    return jnp.concatenate([top, bottom], axis=0)                  # (4, 4)


_edge_transform_batched = jax.vmap(_edge_transform_single)


# ---------------------------------------------------------------------------
# Host-side edge batching (one-time packing, outside the hot path)
# ---------------------------------------------------------------------------
def build_edge_batch(s_t_pairs, loopback_idx, loopback_pairs,
                     s_t_camera_pairs, loopback_camera_pairs,
                     n_pad, camera_align=True):
    """Packs all edges into sublane-dense coordinate planes.

    Returns (edge_specs, e_pad, planes (6,E_pad,N_pad), mask (E_pad,N_pad),
             scalars (E_pad,128)).
    """
    edge_specs, edges = [], []

    def add(spec, src3, tgt3, w, c):
        edge_specs.append(spec)
        edges.append((np.asarray(src3, np.float32),
                      np.asarray(tgt3, np.float32), float(w), float(c)))

    for idx, (src, tgt) in enumerate(s_t_pairs):
        add(("st", idx), src, tgt, 1.0, 5.0)                 # clamp(0, 5)
    for lidx, (src, tgt) in zip(loopback_idx, loopback_pairs):
        add(("loopback", lidx), src, tgt, 0.1, NO_CLAMP)
    if camera_align:
        for idx, (src, tgt) in enumerate(s_t_camera_pairs):
            add(("st", idx), src, tgt, 10.0, NO_CLAMP)
        for lidx, (src, tgt) in zip(loopback_idx, loopback_camera_pairs):
            add(("loopback", lidx), src, tgt, 0.01, NO_CLAMP)

    n_edges = len(edges)
    e_pad = max(8, ((n_edges + 7) // 8) * 8)                 # sublane aligned

    planes = np.zeros((6, e_pad, n_pad), np.float32)
    mask = np.zeros((e_pad, n_pad), np.float32)
    scalars = np.zeros((e_pad, 128), np.float32)             # padding rows: w=0
    for e, (src3, tgt3, w, c) in enumerate(edges):
        n = src3.shape[0]
        planes[0, e, :n] = src3[:, 0]
        planes[1, e, :n] = src3[:, 1]
        planes[2, e, :n] = src3[:, 2]
        planes[3, e, :n] = tgt3[:, 0]
        planes[4, e, :n] = tgt3[:, 1]
        planes[5, e, :n] = tgt3[:, 2]
        mask[e, :n] = 1.0
        scalars[e, 0] = 1.0 / max(n, 1)                      # guard n == 0
        scalars[e, 1] = w
        scalars[e, 2] = c

    return (edge_specs, e_pad, jnp.asarray(planes), jnp.asarray(mask),
            jnp.asarray(scalars))


# ---------------------------------------------------------------------------
# Forward pass (matches Pcd_Global_Alignment.forward) -- one kernel dispatch
# ---------------------------------------------------------------------------
def make_forward(edge_specs, e_pad):
    n_edges = len(edge_specs)

    def forward(params, planes, mask, scalars):
        # One batched SE3_exp over all parameter indices (replaces the
        # per-edge Python loop of tiny dispatches).
        all_T = _edge_transform_batched(
            params["scale"], params["R"], params["T"],
            params["rot_delta"], params["trans_delta"])       # (P, 4, 4)

        rows = []
        for kind, arg in edge_specs:
            if kind == "st":
                T4 = all_T[arg]
            else:                                             # loopback chain
                s, t = arg
                T4 = jnp.eye(4, dtype=jnp.float32)
                for i in range(s - 1, t - 1, -1):
                    T4 = all_T[i] @ T4
            rows.append(T4[:3, :].reshape(-1))                # (12,)
        trans_rows = jnp.stack(rows)                          # (E, 12)

        coeff = jnp.zeros((e_pad, 128), jnp.float32)
        coeff = coeff.at[:n_edges, :12].set(trans_rows)
        return alignment_loss(coeff, planes, mask, scalars)

    return jax.jit(forward)


# ---------------------------------------------------------------------------
# Deterministic synthetic scene (mirrors init_model / get_pcd_pairs output)
# ---------------------------------------------------------------------------
# TODO(synk): scene-graph construction (read_meta / get_correlation /
#             get_pcd_pairs) is host-side file/dict preprocessing in the
#             original module; reproduced here with synthetic data.
def _apply_pose(pose, pts):
    return (pose[:3, :3] @ pts.T).T + pose[:3, 3]


if __name__ == "__main__":
    key = jax.random.PRNGKey(0)
    N = 256        # overlap points per edge
    K = 2          # shared keyframe camera centers per edge
    n_edges = 2    # sequential s->t edges (keyframe blocks 0-1, 1-2)
    N_PAD = 256    # lane-aligned point padding (multiple of 128)
    camera_align = True

    keys = jax.random.split(key, 16)

    # init_poses for the sequential edges (small rotation + translation)
    init_poses = []
    for e in range(n_edges):
        phi = 0.1 * jax.random.normal(keys[e], (3,), jnp.float32)
        R0 = SO3_exp(phi)
        T0 = 0.5 * jax.random.normal(keys[2 + e], (3,), jnp.float32)
        pose = jnp.eye(4, dtype=jnp.float32)
        pose = pose.at[:3, :3].set(R0)
        pose = pose.at[:3, 3].set(T0)
        init_poses.append(pose)

    # Parameters (stacked), exactly as in init_model():
    params = {
        "scale":       jnp.ones((n_edges, 3), jnp.float32),
        "R":           jnp.stack([p[:3, :3] for p in init_poses]),
        "T":           jnp.stack([p[:3, 3] for p in init_poses]),
        "rot_delta":   jnp.zeros((n_edges, 3), jnp.float32),
        "trans_delta": jnp.zeros((n_edges, 3), jnp.float32),
    }

    # Sequential pairs: target ~= init_pose(source) + noise (3D points)
    s_t_pairs, s_t_camera_pairs = [], []
    for e in range(n_edges):
        src3 = jax.random.normal(keys[4 + e], (N, 3), jnp.float32)
        noise = 0.01 * jax.random.normal(keys[6 + e], (N, 3), jnp.float32)
        tgt3 = _apply_pose(init_poses[e], src3) + noise
        s_t_pairs.append((src3, tgt3))

        cam_src3 = jax.random.normal(keys[8 + e], (K, 3), jnp.float32)
        cam_tgt3 = _apply_pose(init_poses[e], cam_src3)
        s_t_camera_pairs.append((cam_src3, cam_tgt3))

    # Loopback edge between keyframe blocks 0 and 2: (s, t) = (2, 0)
    loopback_idx = [(2, 0)]
    lb_src3 = jax.random.normal(keys[10], (N, 3), jnp.float32)
    lb_pose = init_poses[0] @ init_poses[1]
    lb_tgt3 = _apply_pose(lb_pose, lb_src3) + 0.01 * jax.random.normal(
        keys[11], (N, 3), jnp.float32)
    loopback_pairs = [(lb_src3, lb_tgt3)]

    lb_cam_src3 = jax.random.normal(keys[12], (K, 3), jnp.float32)
    lb_cam_tgt3 = _apply_pose(lb_pose, lb_cam_src3)
    loopback_camera_pairs = [(lb_cam_src3, lb_cam_tgt3)]

    # ---- one-time host-side packing of all edges ----
    edge_specs, e_pad, planes, mask, scalars = build_edge_batch(
        s_t_pairs, loopback_idx, loopback_pairs,
        s_t_camera_pairs, loopback_camera_pairs,
        n_pad=N_PAD, camera_align=camera_align)

    forward = make_forward(edge_specs, e_pad)
    loss = forward(params, planes, mask, scalars)
    loss = jax.block_until_ready(loss)
    assert jnp.isfinite(loss)
    print("KERNEL_OK")
</pallas_src>

<mosaic_0001>
module attributes {stable_mosaic.version = 11 : i64} {
  func.func @_alignment_loss_kernel(%arg0: memref<8x128xf32, #tpu.memory_space<vmem>>, %arg1: memref<6x8x256xf32, #tpu.memory_space<vmem>>, %arg2: memref<8x256xf32, #tpu.memory_space<vmem>>, %arg3: memref<8x128xf32, #tpu.memory_space<vmem>>, %arg4: memref<1x1xf32, #tpu.memory_space<smem>>) attributes {dimension_semantics = [], scalar_prefetch = 0 : i64, scratch_operands = 0 : i64, tpu.core_type = #tpu.core_type<tc>} {
    %c0 = arith.constant 0 : index
    %c0_0 = arith.constant 0 : index
    %c0_1 = arith.constant 0 : index
    %0 = vector.load %arg1[%c0, %c0_0, %c0_1] : memref<6x8x256xf32, #tpu.memory_space<vmem>>, vector<1x8x256xf32>
    %1 = vector.shape_cast %0 : vector<1x8x256xf32> to vector<8x256xf32>
    %c1 = arith.constant 1 : index
    %c0_2 = arith.constant 0 : index
    %c0_3 = arith.constant 0 : index
    %2 = vector.load %arg1[%c1, %c0_2, %c0_3] : memref<6x8x256xf32, #tpu.memory_space<vmem>>, vector<1x8x256xf32>
    %3 = vector.shape_cast %2 : vector<1x8x256xf32> to vector<8x256xf32>
    %c2 = arith.constant 2 : index
    %c0_4 = arith.constant 0 : index
    %c0_5 = arith.constant 0 : index
    %4 = vector.load %arg1[%c2, %c0_4, %c0_5] : memref<6x8x256xf32, #tpu.memory_space<vmem>>, vector<1x8x256xf32>
    %5 = vector.shape_cast %4 : vector<1x8x256xf32> to vector<8x256xf32>
    %c0_6 = arith.constant 0 : index
    %c0_7 = arith.constant 0 : index
    %6 = vector.load %arg0[%c0_6, %c0_7] : memref<8x128xf32, #tpu.memory_space<vmem>>, vector<8x128xf32>
    %c0_8 = arith.constant 0 : index
    %c0_9 = arith.constant 0 : index
    %7 = vector.load %arg2[%c0_8, %c0_9] : memref<8x256xf32, #tpu.memory_space<vmem>>, vector<8x256xf32>
    %cst = arith.constant 0.000000e+00 : f32
    %8 = vector.broadcast %cst : f32 to vector<8x256xf32>
    %9 = vector.extract_strided_slice %6 {offsets = [0, 0], sizes = [8, 1], strides = [1, 1]} : vector<8x128xf32> to vector<8x1xf32>
    %10 = vector.extract_strided_slice %6 {offsets = [0, 1], sizes = [8, 1], strides = [1, 1]} : vector<8x128xf32> to vector<8x1xf32>
    %11 = vector.extract_strided_slice %6 {offsets = [0, 2], sizes = [8, 1], strides = [1, 1]} : vector<8x128xf32> to vector<8x1xf32>
    %12 = vector.extract_strided_slice %6 {offsets = [0, 3], sizes = [8, 1], strides = [1, 1]} : vector<8x128xf32> to vector<8x1xf32>
    %13 = vector.broadcast %9 : vector<8x1xf32> to vector<8x256xf32>
    %14 = arith.mulf %13, %1 : vector<8x256xf32>
    %15 = vector.broadcast %10 : vector<8x1xf32> to vector<8x256xf32>
    %16 = arith.mulf %15, %3 : vector<8x256xf32>
    %17 = arith.addf %14, %16 : vector<8x256xf32>
    %18 = vector.broadcast %11 : vector<8x1xf32> to vector<8x256xf32>
    %19 = arith.mulf %18, %5 : vector<8x256xf32>
    %20 = arith.addf %17, %19 : vector<8x256xf32>
    %21 = vector.broadcast %12 : vector<8x1xf32> to vector<8x256xf32>
    %22 = arith.addf %20, %21 : vector<8x256xf32>
    %c3 = arith.constant 3 : index
    %c0_10 = arith.constant 0 : index
    %c0_11 = arith.constant 0 : index
    %23 = vector.load %arg1[%c3, %c0_10, %c0_11] : memref<6x8x256xf32, #tpu.memory_space<vmem>>, vector<1x8x256xf32>
    %24 = vector.shape_cast %23 : vector<1x8x256xf32> to vector<8x256xf32>
    %25 = arith.subf %22, %24 : vector<8x256xf32>
    %26 = arith.mulf %25, %25 : vector<8x256xf32>
    %27 = arith.addf %8, %26 : vector<8x256xf32>
    %28 = vector.extract_strided_slice %6 {offsets = [0, 4], sizes = [8, 1], strides = [1, 1]} : vector<8x128xf32> to vector<8x1xf32>
    %29 = vector.extract_strided_slice %6 {offsets = [0, 5], sizes = [8, 1], strides = [1, 1]} : vector<8x128xf32> to vector<8x1xf32>
    %30 = vector.extract_strided_slice %6 {offsets = [0, 6], sizes = [8, 1], strides = [1, 1]} : vector<8x128xf32> to vector<8x1xf32>
    %31 = vector.extract_strided_slice %6 {offsets = [0, 7], sizes = [8, 1], strides = [1, 1]} : vector<8x128xf32> to vector<8x1xf32>
    %32 = vector.broadcast %28 : vector<8x1xf32> to vector<8x256xf32>
    %33 = arith.mulf %32, %1 : vector<8x256xf32>
    %34 = vector.broadcast %29 : vector<8x1xf32> to vector<8x256xf32>
    %35 = arith.mulf %34, %3 : vector<8x256xf32>
    %36 = arith.addf %33, %35 : vector<8x256xf32>
    %37 = vector.broadcast %30 : vector<8x1xf32> to vector<8x256xf32>
    %38 = arith.mulf %37, %5 : vector<8x256xf32>
    %39 = arith.addf %36, %38 : vector<8x256xf32>
    %40 = vector.broadcast %31 : vector<8x1xf32> to vector<8x256xf32>
    %41 = arith.addf %39, %40 : vector<8x256xf32>
    %c4 = arith.constant 4 : index
    %c0_12 = arith.constant 0 : index
    %c0_13 = arith.constant 0 : index
    %42 = vector.load %arg1[%c4, %c0_12, %c0_13] : memref<6x8x256xf32, #tpu.memory_space<vmem>>, vector<1x8x256xf32>
    %43 = vector.shape_cast %42 : vector<1x8x256xf32> to vector<8x256xf32>
    %44 = arith.subf %41, %43 : vector<8x256xf32>
    %45 = arith.mulf %44, %44 : vector<8x256xf32>
    %46 = arith.addf %27, %45 : vector<8x256xf32>
    %47 = vector.extract_strided_slice %6 {offsets = [0, 8], sizes = [8, 1], strides = [1, 1]} : vector<8x128xf32> to vector<8x1xf32>
    %48 = vector.extract_strided_slice %6 {offsets = [0, 9], sizes = [8, 1], strides = [1, 1]} : vector<8x128xf32> to vector<8x1xf32>
    %49 = vector.extract_strided_slice %6 {offsets = [0, 10], sizes = [8, 1], strides = [1, 1]} : vector<8x128xf32> to vector<8x1xf32>
    %50 = vector.extract_strided_slice %6 {offsets = [0, 11], sizes = [8, 1], strides = [1, 1]} : vector<8x128xf32> to vector<8x1xf32>
    %51 = vector.broadcast %47 : vector<8x1xf32> to vector<8x256xf32>
    %52 = arith.mulf %51, %1 : vector<8x256xf32>
    %53 = vector.broadcast %48 : vector<8x1xf32> to vector<8x256xf32>
    %54 = arith.mulf %53, %3 : vector<8x256xf32>
    %55 = arith.addf %52, %54 : vector<8x256xf32>
    %56 = vector.broadcast %49 : vector<8x1xf32> to vector<8x256xf32>
    %57 = arith.mulf %56, %5 : vector<8x256xf32>
    %58 = arith.addf %55, %57 : vector<8x256xf32>
    %59 = vector.broadcast %50 : vector<8x1xf32> to vector<8x256xf32>
    %60 = arith.addf %58, %59 : vector<8x256xf32>
    %c5 = arith.constant 5 : index
    %c0_14 = arith.constant 0 : index
    %c0_15 = arith.constant 0 : index
    %61 = vector.load %arg1[%c5, %c0_14, %c0_15] : memref<6x8x256xf32, #tpu.memory_space<vmem>>, vector<1x8x256xf32>
    %62 = vector.shape_cast %61 : vector<1x8x256xf32> to vector<8x256xf32>
    %63 = arith.subf %60, %62 : vector<8x256xf32>
    %64 = arith.mulf %63, %63 : vector<8x256xf32>
    %65 = arith.addf %46, %64 : vector<8x256xf32>
    %cst_16 = arith.constant 9.99999996E-13 : f32
    %66 = vector.broadcast %cst_16 : f32 to vector<8x256xf32>
    %67 = arith.addf %65, %66 : vector<8x256xf32>
    %68 = math.rsqrt %67 : vector<8x256xf32>
    %69 = arith.mulf %65, %68 : vector<8x256xf32>
    %70 = arith.mulf %7, %69 : vector<8x256xf32>
    %cst_17 = arith.constant dense<0.000000e+00> : vector<8xf32>
    %71 = vector.multi_reduction <add>, %70, %cst_17 [1] : vector<8x256xf32> to vector<8xf32>
    %72 = vector.shape_cast %71 : vector<8xf32> to vector<8x1xf32>
    %c0_18 = arith.constant 0 : index
    %c0_19 = arith.constant 0 : index
    %73 = vector.load %arg3[%c0_18, %c0_19] : memref<8x128xf32, #tpu.memory_space<vmem>>, vector<8x1xf32>
    %c0_20 = arith.constant 0 : index
    %c1_21 = arith.constant 1 : index
    %74 = vector.load %arg3[%c0_20, %c1_21] : memref<8x128xf32, #tpu.memory_space<vmem>>, vector<8x1xf32>
    %c0_22 = arith.constant 0 : index
    %c2_23 = arith.constant 2 : index
    %75 = vector.load %arg3[%c0_22, %c2_23] : memref<8x128xf32, #tpu.memory_space<vmem>>, vector<8x1xf32>
    %76 = arith.mulf %72, %73 : vector<8x1xf32>
    %cst_24 = arith.constant 0.000000e+00 : f32
    %77 = vector.broadcast %cst_24 : f32 to vector<8x1xf32>
    %78 = arith.maximumf %77, %76 : vector<8x1xf32>
    %79 = arith.minimumf %75, %78 : vector<8x1xf32>
    %80 = arith.mulf %74, %79 : vector<8x1xf32>
    %81 = vector.shape_cast %80 : vector<8x1xf32> to vector<1x8x1xf32>
    %cst_25 = arith.constant dense<0.000000e+00> : vector<1xf32>
    %82 = vector.multi_reduction <add>, %81, %cst_25 [1, 2] : vector<1x8x1xf32> to vector<1xf32>
    %83 = vector.shape_cast %82 : vector<1xf32> to vector<1x1x1xf32>
    %84 = vector.extract %83[0, 0, 0] : f32 from vector<1x1x1xf32>
    %c0_26 = arith.constant 0 : index
    %c0_27 = arith.constant 0 : index
    %85 = memref.load %arg4[%c0_26, %c0_27] : memref<1x1xf32, #tpu.memory_space<smem>>
    memref.store %84, %arg4[%c0_26, %c0_27] : memref<1x1xf32, #tpu.memory_space<smem>>
    return
  }
}

</mosaic_0001>

<llo_original>
// kernel: forward.1
$region0: #{forward.1}
  #allocation0 [shape = 'u32[]', space=smem, size = 0x4, offset = 0x4, fixed_abs, tag = 'smem constant byte address 0x4 - core index']
  #allocation1 [shape = 'u32[72,128]{1,0:T(1,128)}', space=vmem, size = 0x9000, scoped, tag = 'internal scratch']
  %s0 = inlined_call_operand.vmem [shape: f32[8,128], index: 0, kind: input, shape index: {}]
  %s1 = inlined_call_operand.vmem [shape: f32[6,8,256], index: 1, kind: input, shape index: {}]
  %s2 = inlined_call_operand.vmem [shape: f32[8,256], index: 2, kind: input, shape index: {}]
  %s3 = inlined_call_operand.vmem [shape: f32[8,128], index: 3, kind: input, shape index: {}]
  %s4 = inlined_call_operand.hbm [shape: f32[1,1], index: 4, kind: output, shape index: {}]
  %s5 = sld [smem:[#allocation0]]
  $region26: #{forward.1} parent=0
    _
  %s7 = ssub.s32 1, %s5
  %s8 = scalar_select 0, %s7, %s5
  $region1: #{forward.1} parent=0
    #allocation2 [shape = 'u8[512]{0}', space=smem, size = 0x200, scoped, tag = 'output window, operand 0, single buffered']
    #allocation3 [shape = 's32[1]{0}', space=sflag, size = 0x4, scoped, tag = 'scoped memory for forward.1']
    %9 = vsyncpa [#allocation3], 0
    // Predicated region
    $region2: #{forward.1} parent=1 // pred_check
      _
    $region3: #{forward.1} parent=1 // pred_check_branch
      %11 = sbr.rel (0) target = $region5
    $region4: #{forward.1} parent=1 // pred_region
      _
    $region5: #{forward.1} parent=1 // pred_fallthru
      _
    // Predicated region
    $region6: #{forward.1} parent=1 // pred_check
      _
    $region7: #{forward.1} parent=1 // pred_check_branch
      %13 = sbr.rel (0) target = $region9
    $region8: #{forward.1} parent=1 // pred_region
      _
    $region9: #{forward.1} parent=1 // pred_fallthru
      _
    // Predicated region
    $region10: #{forward.1} parent=1 // pred_check
      _
    $region11: #{forward.1} parent=1 // pred_check_branch
      %15 = sbr.rel (0) target = $region13
    $region12: #{forward.1} parent=1 // pred_region
      _
    $region13: #{forward.1} parent=1 // pred_fallthru
      _
    // Predicated region
    $region14: #{forward.1} parent=1 // pred_check
      _
    $region15: #{forward.1} parent=1 // pred_check_branch
      %17 = sbr.rel (0) target = $region17
    $region16: #{forward.1} parent=1 // pred_region
      _
    $region17: #{forward.1} parent=1 // pred_fallthru
      _
    %v18 = vld [vmem:[%s1] sm:$0xff]
    %v19 = vld [vmem:[%s1 + $0x8] sm:$0xff]
    %s20 = scalar_lea.vmem %s1, 16
    %v21 = vld [vmem:[%s20] sm:$0xff]
    %v22 = vld [vmem:[%s20 + $0x8] sm:$0xff]
    %s23 = scalar_lea.vmem %s1, 32
    %v24 = vld [vmem:[%s23] sm:$0xff]
    %v25 = vld [vmem:[%s23 + $0x8] sm:$0xff]
    %v26 = vld [vmem:[%s0] sm:$0xff]
    %v27 = vld [vmem:[%s2] sm:$0xff]
    %v28 = vld [vmem:[%s2 + $0x8] sm:$0xff]
    %30 = vset.pattern.permute.xlu0 0
    %31 = vperm.xlu0 %30, %v26
    %v32 = vpop.permute.xlu0 %31
    %v34 = vmul.f32 %v32, %v18
    %v35 = vmul.f32 %v32, %v19
    %36 = vset.pattern.permute.xlu0 1
    %37 = vperm.xlu0 %36, %v26
    %v38 = vpop.permute.xlu0 %37
    %v40 = vmul.f32 %v38, %v21
    %v41 = vmul.f32 %v38, %v22
    %v42 = vadd.f32 %v34, %v40
    %v43 = vadd.f32 %v35, %v41
    %44 = vset.pattern.permute.xlu0 2
    %45 = vperm.xlu0 %44, %v26
    %v46 = vpop.permute.xlu0 %45
    %v48 = vmul.f32 %v46, %v24
    %v49 = vmul.f32 %v46, %v25
    %v50 = vadd.f32 %v42, %v48
    %v51 = vadd.f32 %v43, %v49
    %52 = vset.pattern.permute.xlu0 3
    %53 = vperm.xlu0 %52, %v26
    %v54 = vpop.permute.xlu0 %53
    %v56 = vadd.f32 %v50, %v54
    %v57 = vadd.f32 %v51, %v54
    %s58 = scalar_lea.vmem %s1, 48
    %v59 = vld [vmem:[%s58] sm:$0xff]
    %v60 = vld [vmem:[%s58 + $0x8] sm:$0xff]
    %v61 = vsub.f32 %v56, %v59
    %v62 = vsub.f32 %v57, %v60
    %v63 = vmul.f32 %v61, %v61
    %v64 = vmul.f32 %v62, %v62
    %v65 = vadd.f32 %v63, 0.0
    %v66 = vadd.f32 %v64, 0.0
    %67 = vset.pattern.permute.xlu0 4
    %68 = vperm.xlu0 %67, %v26
    %v69 = vpop.permute.xlu0 %68
    %v71 = vmul.f32 %v69, %v18
    %v72 = vmul.f32 %v69, %v19
    %73 = vset.pattern.permute.xlu0 5
    %74 = vperm.xlu0 %73, %v26
    %v75 = vpop.permute.xlu0 %74
    %v77 = vmul.f32 %v75, %v21
    %v78 = vmul.f32 %v75, %v22
    %v79 = vadd.f32 %v71, %v77
    %v80 = vadd.f32 %v72, %v78
    %81 = vset.pattern.permute.xlu0 6
    %82 = vperm.xlu0 %81, %v26
    %v83 = vpop.permute.xlu0 %82
    %v85 = vmul.f32 %v83, %v24
    %v86 = vmul.f32 %v83, %v25
    %v87 = vadd.f32 %v79, %v85
    %v88 = vadd.f32 %v80, %v86
    %89 = vset.pattern.permute.xlu0 7
    %90 = vperm.xlu0 %89, %v26
    %v91 = vpop.permute.xlu0 %90
    %v93 = vadd.f32 %v87, %v91
    %v94 = vadd.f32 %v88, %v91
    %s95 = scalar_lea.vmem %s1, 64
    %v96 = vld [vmem:[%s95] sm:$0xff]
    %v97 = vld [vmem:[%s95 + $0x8] sm:$0xff]
    %v98 = vsub.f32 %v93, %v96
    %v99 = vsub.f32 %v94, %v97
    %v100 = vmul.f32 %v98, %v98
    %v101 = vmul.f32 %v99, %v99
    %v102 = vadd.f32 %v65, %v100
    %v103 = vadd.f32 %v66, %v101
    %104 = vset.pattern.permute.xlu0 8
    %105 = vperm.xlu0 %104, %v26
    %v106 = vpop.permute.xlu0 %105
    %v108 = vmul.f32 %v106, %v18
    %v109 = vmul.f32 %v106, %v19
    %110 = vset.pattern.permute.xlu0 9
    %111 = vperm.xlu0 %110, %v26
    %v112 = vpop.permute.xlu0 %111
    %v114 = vmul.f32 %v112, %v21
    %v115 = vmul.f32 %v112, %v22
    %v116 = vadd.f32 %v108, %v114
    %v117 = vadd.f32 %v109, %v115
    %118 = vset.pattern.permute.xlu0 10
    %119 = vperm.xlu0 %118, %v26
    %v120 = vpop.permute.xlu0 %119
    %v122 = vmul.f32 %v120, %v24
    %v123 = vmul.f32 %v120, %v25
    %v124 = vadd.f32 %v116, %v122
    %v125 = vadd.f32 %v117, %v123
    %126 = vset.pattern.permute.xlu0 11
    %127 = vperm.xlu0 %126, %v26
    %v128 = vpop.permute.xlu0 %127
    %v130 = vadd.f32 %v124, %v128
    %v131 = vadd.f32 %v125, %v128
    %s132 = scalar_lea.vmem %s1, 80
    %v133 = vld [vmem:[%s132] sm:$0xff]
    %v134 = vld [vmem:[%s132 + $0x8] sm:$0xff]
    %v135 = vsub.f32 %v130, %v133
    %v136 = vsub.f32 %v131, %v134
    %v137 = vmul.f32 %v135, %v135
    %v138 = vmul.f32 %v136, %v136
    %v139 = vadd.f32 %v102, %v137
    %v140 = vadd.f32 %v103, %v138
    %v141 = vadd.f32 %v139, 1e-12
    %v142 = vadd.f32 %v140, 1e-12
    %v143 = vrsqrt.pop %v141
    %v144 = vmul.f32 %v143, %v141
    %v145 = vmul.f32 %v144, %v143
    %v146 = vmul.f32 0.5, %v145
    %v147 = vsub.f32 1.5, %v146
    %v148 = vmul.f32 %v143, %v147
    %vm149 = vweird.f32 %v141
    %vm150 = vweird.f32 %v143
    %vm151 = vmor %vm149, %vm150
    %v152 = vsel %vm151, %v143, %v148
    %v153 = vrsqrt.pop %v142
    %v154 = vmul.f32 %v153, %v142
    %v155 = vmul.f32 %v154, %v153
    %v156 = vmul.f32 0.5, %v155
    %v157 = vsub.f32 1.5, %v156
    %v158 = vmul.f32 %v153, %v157
    %vm159 = vweird.f32 %v142
    %vm160 = vweird.f32 %v153
    %vm161 = vmor %vm159, %vm160
    %v162 = vsel %vm161, %v153, %v158
    %v163 = vmul.f32 %v139, %v152
    %v164 = vmul.f32 %v140, %v162
    %v165 = vmul.f32 %v27, %v163
    %v166 = vmul.f32 %v28, %v164
    %v167 = vadd.f32 %v165, %v166
    %168 = vadd.xlane.f32.xlu0 %v167
    %v169 = vpop.xlane.xlu0 %168
    %v170 = vld [vmem:[%s3] sm:$0xff]
    %v171 = vmul.f32 %v169, %v170
    %v172 = vmax.f32 %v171, 0.0
    %174 = vrot.lane.b32.xlu0 %v172, 2
    %v175 = vpop.permute.xlu0 %174
    %v177 = vmin.f32 %v170, %v175
    %179 = vrot.lane.b32.xlu0 %v177, 127
    %v180 = vpop.permute.xlu0 %179
    %v182 = vmul.f32 %v170, %v180
    %184 = vrot.lane.b32.xlu0 %v182, 127
    %v185 = vpop.permute.xlu0 %184
    %vm187 = vcmask 7168
    %v188 = vsel %vm187, %v185, 0.0
    %189 = vadd.xlane.f32.xlu0 %v188
    %v190 = vpop.xlane.xlu0 %189
    %v191 = vrot.slane %v190, 4
    %v192 = vadd.f32 %v190, %v191
    %v193 = vrot.slane %v192, 2
    %v194 = vadd.f32 %v192, %v193
    %v195 = vrot.slane %v194, 1
    %v196 = vadd.f32 %v194, %v195
    %s197 = vtos %v196
    %s198 = scalar_lea.smem [#allocation2], 0
    %199 = sst [smem:[%s198]] %s197
    // Predicated region
    $region18: #{forward.1} parent=1 // pred_check
      _
    $region19: #{forward.1} parent=1 // pred_check_branch
      %201 = sbr.rel (0) target = $region21
    $region20: #{forward.1} parent=1 // pred_region
      %203 = vsyncadd [#allocation3], 0
      %s205 = sshll.u32 %s4, 4
      %s206 = int_to_ptr.hbm [resolvable:$true] %s205
      %208 = dma.smem_to_hbm [#allocation2], 16, %s206, [#allocation3]
    $region21: #{forward.1} parent=1 // pred_fallthru
      _
    // Predicated region
    $region22: #{forward.1} parent=1 // pred_check
      _
    $region23: #{forward.1} parent=1 // pred_check_branch
      %210 = sbr.rel (0) target = $region25
    $region24: #{forward.1} parent=1 // pred_region
      %212 = dma.done [#allocation3], 16
    $region25: #{forward.1} parent=1 // pred_fallthru
      _
    %213 = sfence
    %214 = vsyncpa [#allocation3], 1

</llo_original>
